<compile_context>
chip_gen: v5e
topology: v5e:2x2
jax: 0.10.0
libtpu: 0.0.40
codegen_flags: <defaults>
</compile_context>

<pallas_src>
import numpy as np
import jax
import jax.numpy as jnp
from jax.experimental import pallas as pl
from jax.experimental.pallas import tpu as pltpu


def _round_up(x, m):
    return ((x + m - 1) // m) * m


def _vmem_capacity_bytes():
    try:
        cap = getattr(pltpu.get_tpu_info(), "vmem_capacity_bytes", None)
        if cap:
            return int(cap)
    except Exception:
        pass
    return 64 * 2 ** 20  # conservative: v7x per-TC physical VMEM


def owlvit_loss_kernel(logits_ref, tgt_ref, boxes_ref, scal_ref, out_ref, acc_ref):
    # grid = (2 parallel chunks, K arbitrary tiles per chunk)
    k = pl.program_id(1)
    k_last = pl.num_programs(1) - 1

    # -------- init lane-parallel accumulators at the start of each chunk ----
    @pl.when(k == 0)
    def _init():
        acc_ref[...] = jnp.zeros_like(acc_ref)

    # -------- per-tile weighted cross entropy (lane axis = queries) ---------
    logits = logits_ref[...]                       # (C, TM), native dtype
    tgt = tgt_ref[...]                             # (1, TM) i32, -1 = padded col
    eos = scal_ref[0]                              # eos_coef (f32, SMEM)

    col_max = jnp.max(logits, axis=0, keepdims=True)            # (1, TM) native
    shifted = (logits - col_max).astype(jnp.float32)             # upcast for exp
    lse = jnp.log(jnp.sum(jnp.exp(shifted), axis=0, keepdims=True))   # (1, TM)
    cls_ids = jax.lax.broadcasted_iota(jnp.int32, shifted.shape, 0)   # class idx
    tgt_shift = jnp.sum(jnp.where(cls_ids == tgt, shifted, 0.0),
                        axis=0, keepdims=True)                        # (1, TM)
    nll = lse - tgt_shift                                             # (1, TM)
    # empty_weight is 1.0 except class 0 -> eos_coef; padded cols -> 0.
    w = jnp.where(tgt < 0, 0.0, jnp.where(tgt == 0, eos, 1.0))        # (1, TM)

    # pure VPU adds, no per-step cross-lane reduction
    acc_ref[...] += jnp.concatenate([w * nll, w], axis=0)             # (2, TM)

    # -------- finalize: lane reductions + box losses + output write ---------
    @pl.when(k == k_last)
    def _finalize():
        sums = jnp.sum(acc_ref[...], axis=1, keepdims=True)           # (2, 1)
        wnll = sums[0:1, :]
        wsum = sums[1:2, :]

        nb = scal_ref[1]                       # num_boxes (f32, SMEM)
        boxes = boxes_ref[...]                 # (8, Npad) f32, lane-dense
        s = boxes[0:4, :]                      # src cx,cy,w,h
        t = boxes[4:8, :]                      # tgt cx,cy,w,h

        # L1: sum |src - tgt| / num_boxes (padded lanes identical -> 0)
        l1 = jnp.sum(jnp.abs(s - t), axis=(0, 1), keepdims=True) / nb

        # GIoU on diagonal pairs, all ops full-width (1, Npad) rows.
        scx, scy, sw, sh = boxes[0:1, :], boxes[1:2, :], boxes[2:3, :], boxes[3:4, :]
        tcx, tcy, tw, th = boxes[4:5, :], boxes[5:6, :], boxes[6:7, :], boxes[7:8, :]
        sx1, sy1 = scx - 0.5 * sw, scy - 0.5 * sh
        sx2, sy2 = scx + 0.5 * sw, scy + 0.5 * sh
        tx1, ty1 = tcx - 0.5 * tw, tcy - 0.5 * th
        tx2, ty2 = tcx + 0.5 * tw, tcy + 0.5 * th

        ix1 = jnp.maximum(sx1, tx1)
        iy1 = jnp.maximum(sy1, ty1)
        ix2 = jnp.minimum(sx2, tx2)
        iy2 = jnp.minimum(sy2, ty2)
        inter = jnp.maximum(ix2 - ix1, 0.0) * jnp.maximum(iy2 - iy1, 0.0)

        a1 = jnp.maximum(sx2 - sx1, 0.0) * jnp.maximum(sy2 - sy1, 0.0)
        a2 = jnp.maximum(tx2 - tx1, 0.0) * jnp.maximum(ty2 - ty1, 0.0)
        union = a1 + a2 - inter
        # TODO(synk): no epsilon, matches the torch reference exactly; real
        # degenerate (zero-area) boxes would produce NaN/Inf just like torch.
        iou = inter / union

        cx1 = jnp.minimum(sx1, tx1)
        cy1 = jnp.minimum(sy1, ty1)
        cx2 = jnp.maximum(sx2, tx2)
        cy2 = jnp.maximum(sy2, ty2)
        carea = jnp.maximum(cx2 - cx1, 0.0) * jnp.maximum(cy2 - cy1, 0.0)
        giou = iou - (carea - union) / carea           # padded lanes == 1

        gi = jnp.sum(1.0 - giou, axis=(0, 1), keepdims=True) / nb

        # lane-dense (8,128) output block for this chunk:
        #   row 0, lanes [0..3] = [sum(w*nll), sum(w), loss_bbox, loss_giou]
        sub = jax.lax.broadcasted_iota(jnp.int32, out_ref.shape, 0)
        lane = jax.lax.broadcasted_iota(jnp.int32, out_ref.shape, 1)
        r0 = sub == 0
        out_ref[...] = (jnp.where(r0 & (lane == 0), wnll, 0.0)
                        + jnp.where(r0 & (lane == 1), wsum, 0.0)
                        + jnp.where(r0 & (lane == 2), l1, 0.0)
                        + jnp.where(r0 & (lane == 3), gi, 0.0))


def owlvit_loss_pallas(logits_flat, tgt_cls_flat, src_boxes, tgt_boxes,
                       eos_coef, num_boxes, *, tm=None):
    """Returns (loss_ce, loss_bbox, loss_giou) as f32 scalars."""
    M, C = logits_flat.shape
    N = src_boxes.shape[0]
    itemsize = jnp.dtype(logits_flat.dtype).itemsize

    # ----- per-generation VMEM budget -> lane-tile size along queries -------
    vmem_cap = _vmem_capacity_bytes()        # 64 MiB (v7x) / 128 MiB (v5e/v6e)
    if tm is None:
        # ~3/8 of physical VMEM for the double-buffered logits tile
        # (=> ~24 MiB on v7x, ~48 MiB on v5e/v6e), split over 2 buffers.
        per_buf = (vmem_cap * 3 // 8) // 2
        tm = max(128, (per_buf // max(1, C * itemsize + 20)) // 128 * 128)
    per_chunk_min = _round_up(max(1, -(-M // 2)), 128)   # ceil(M/2) -> lanes
    tm_eff = max(128, min(_round_up(tm, 128), per_chunk_min))
    m_pad = _round_up(M, 2 * tm_eff)
    grid_k = m_pad // (2 * tm_eff)           # arbitrary steps per parallel chunk

    # ----- pad M (zero-weight columns), transpose to lane-dense (C, M) ------
    if m_pad > M:
        logits_flat = jnp.pad(logits_flat, ((0, m_pad - M), (0, 0)))
        tgt_cls_flat = jnp.pad(tgt_cls_flat, ((0, m_pad - M), (0, 0)),
                               constant_values=-1)       # -1 => weight 0
    logits_cm = logits_flat.T                            # (C, m_pad)
    tgt_row = tgt_cls_flat.reshape(1, m_pad).astype(jnp.int32)

    # ----- lane-dense box packing: (8, Npad) with identical dummy padding ---
    n_pad = max(128, _round_up(N, 128))
    dummy = jnp.array([0.5, 0.5, 0.1, 0.1], jnp.float32)
    if n_pad > N:
        pad_rows = jnp.tile(dummy[None, :], (n_pad - N, 1))
        src_p = jnp.concatenate([src_boxes.astype(jnp.float32), pad_rows], axis=0)
        tgt_p = jnp.concatenate([tgt_boxes.astype(jnp.float32), pad_rows], axis=0)
    else:
        src_p = src_boxes.astype(jnp.float32)
        tgt_p = tgt_boxes.astype(jnp.float32)
    boxes_packed = jnp.concatenate([src_p.T, tgt_p.T], axis=0)   # (8, n_pad)

    scalars = jnp.stack([jnp.asarray(eos_coef, jnp.float32),
                         jnp.asarray(num_boxes, jnp.float32)])   # (2,) SMEM

    # ----- VMEM limit (actual need, kept below physical cap) ----------------
    vmem_need = (2 * (C * tm_eff * itemsize + tm_eff * 4)    # logits+tgt, 2 bufs
                 + 2 * 8 * n_pad * 4                         # packed boxes
                 + 8 * tm_eff * 4                            # (2,TM) scratch pad
                 + 2 * 16 * 128 * 4                          # output
                 + 256 * 1024)                               # slack
    vmem_limit = int(min(vmem_cap - 2 * 2 ** 20,
                         max(32 * 2 ** 20, vmem_need + 4 * 2 ** 20)))
    vmem_limit = max(vmem_limit, min(vmem_need + 1 * 2 ** 20, vmem_cap))

    cost = pl.CostEstimate(
        flops=10 * m_pad * C + 64 * n_pad,
        transcendentals=m_pad * C,
        bytes_accessed=m_pad * C * itemsize + m_pad * 4 + 8 * n_pad * 4 + 16 * 128 * 4)

    out = pl.pallas_call(
        owlvit_loss_kernel,
        out_shape=jax.ShapeDtypeStruct((16, 128), jnp.float32),
        grid_spec=pltpu.PrefetchScalarGridSpec(
            num_scalar_prefetch=0,
            grid=(2, grid_k),                                   # (parallel, arbitrary)
            in_specs=[
                pl.BlockSpec((C, tm_eff), lambda p, k: (0, p * grid_k + k)),
                pl.BlockSpec((1, tm_eff), lambda p, k: (0, p * grid_k + k)),
                pl.BlockSpec((8, n_pad), lambda p, k: (0, 0)),  # packed boxes
                pl.BlockSpec(memory_space=pltpu.MemorySpace.SMEM),
            ],
            out_specs=pl.BlockSpec((8, 128), lambda p, k: (p, 0)),
            scratch_shapes=[pltpu.VMEM((2, tm_eff), jnp.float32)],
        ),
        compiler_params=pltpu.CompilerParams(
            dimension_semantics=("parallel", "arbitrary"),
            vmem_limit_bytes=vmem_limit),
        cost_estimate=cost,
    )(logits_cm, tgt_row, boxes_packed, scalars)

    # combine the two parallel chunks (trivial wrapper epilogue)
    wnll = out[0, 0] + out[8, 0]
    wsum = out[0, 1] + out[8, 1]
    loss_ce = wnll / wsum
    loss_bbox = out[0, 2]
    loss_giou = out[0, 3]
    return loss_ce, loss_bbox, loss_giou


def jax_reference(logits_flat, tgt_cls_flat, empty_weight,
                  src_boxes, tgt_boxes, num_boxes):
    # pure-JAX reference of the module math (full empty_weight gather)
    logits = logits_flat.astype(jnp.float32)
    tgt = tgt_cls_flat[:, 0]
    lse = jax.nn.logsumexp(logits, axis=-1)
    tgt_logit = jnp.take_along_axis(logits, tgt[:, None], axis=-1)[:, 0]
    nll = lse - tgt_logit
    w = empty_weight[0, tgt]
    ce = jnp.sum(w * nll) / jnp.sum(w)

    nb = jnp.asarray(num_boxes, jnp.float32)
    l1 = jnp.sum(jnp.abs(src_boxes - tgt_boxes)) / nb

    def xyxy(b):
        cx, cy, ww, hh = b[:, 0], b[:, 1], b[:, 2], b[:, 3]
        return jnp.stack([cx - 0.5 * ww, cy - 0.5 * hh,
                          cx + 0.5 * ww, cy + 0.5 * hh], axis=-1)
    s = xyxy(src_boxes)
    t = xyxy(tgt_boxes)
    ix1 = jnp.maximum(s[:, 0], t[:, 0]); iy1 = jnp.maximum(s[:, 1], t[:, 1])
    ix2 = jnp.minimum(s[:, 2], t[:, 2]); iy2 = jnp.minimum(s[:, 3], t[:, 3])
    inter = jnp.clip(ix2 - ix1, 0) * jnp.clip(iy2 - iy1, 0)
    a1 = jnp.clip(s[:, 2] - s[:, 0], 0) * jnp.clip(s[:, 3] - s[:, 1], 0)
    a2 = jnp.clip(t[:, 2] - t[:, 0], 0) * jnp.clip(t[:, 3] - t[:, 1], 0)
    union = a1 + a2 - inter
    iou = inter / union
    cx1 = jnp.minimum(s[:, 0], t[:, 0]); cy1 = jnp.minimum(s[:, 1], t[:, 1])
    cx2 = jnp.maximum(s[:, 2], t[:, 2]); cy2 = jnp.maximum(s[:, 3], t[:, 3])
    carea = jnp.clip(cx2 - cx1, 0) * jnp.clip(cy2 - cy1, 0)
    giou = iou - (carea - union) / carea
    lg = jnp.sum(1.0 - giou) / nb
    return ce, l1, lg


if __name__ == "__main__":
    # ---- configuration (matches OWLVITLoss.__init__) ----
    num_classes = 32          # includes class 0 == background / no-object
    eos_coef = 0.1
    weight_dict = {"loss_ce": 1.0, "loss_bbox": 5.0, "loss_giou": 2.0}

    B, Q = 2, 8               # batch, num_queries

    key = jax.random.PRNGKey(0)
    k_logit, k_box, k_lab, k_tbox = jax.random.split(key, 4)

    # ---- synthetic model outputs ----
    pred_logits = jax.random.normal(k_logit, (B, Q, num_classes), jnp.float32)
    u = jax.random.uniform(k_box, (B, Q, 4), jnp.float32)
    pred_boxes = jnp.concatenate(
        [0.2 + 0.6 * u[..., :2], 0.05 + 0.25 * u[..., 2:]], axis=-1)

    # ---- synthetic targets: batch 0 has 3 objects, batch 1 has 2 ----
    n_per_batch = [3, 2]
    lab = np.asarray(
        jax.random.randint(k_lab, (sum(n_per_batch),), 1, num_classes))
    tb = np.asarray(jax.random.uniform(k_tbox, (sum(n_per_batch), 4)))
    tb = np.concatenate([0.2 + 0.6 * tb[:, :2], 0.05 + 0.25 * tb[:, 2:]], axis=1)
    tgt_labels, tgt_boxes_list, off = [], [], 0
    for n in n_per_batch:
        tgt_labels.append(lab[off:off + n])
        tgt_boxes_list.append(tb[off:off + n])
        off += n

    # ---- matcher (injected dependency of the module) ----
    # TODO(synk): Hungarian assignment (scipy.optimize.linear_sum_assignment)
    # has no Pallas equivalent; a deterministic identity matcher is used here.
    indices = [(np.arange(n, dtype=np.int64), np.arange(n, dtype=np.int64))
               for n in n_per_batch]

    # ---- glue: build kernel inputs exactly as the PyTorch forward would ----
    empty_weight = np.ones((num_classes,), np.float32)
    empty_weight[0] = eos_coef
    empty_weight = jnp.asarray(empty_weight)[None, :]                 # (1, C)

    target_classes = np.zeros((B, Q), np.int32)                       # default = 0
    src_rows, tgt_rows = [], []
    pred_boxes_np = np.asarray(pred_boxes)
    for b, (src_i, tgt_j) in enumerate(indices):
        target_classes[b, src_i] = tgt_labels[b][tgt_j].astype(np.int32)
        src_rows.append(pred_boxes_np[b, src_i])
        tgt_rows.append(tgt_boxes_list[b][tgt_j])
    src_boxes = jnp.asarray(np.concatenate(src_rows, axis=0), jnp.float32)  # (N,4)
    tgt_boxes = jnp.asarray(np.concatenate(tgt_rows, axis=0), jnp.float32)  # (N,4)

    num_boxes = float(sum(n_per_batch))
    logits_flat = pred_logits.reshape(B * Q, num_classes)                   # (M,C)
    tgt_cls_flat = jnp.asarray(target_classes.reshape(B * Q, 1))            # (M,1)

    # ---- run Pallas kernel ----
    loss_ce, loss_bbox, loss_giou = owlvit_loss_pallas(
        logits_flat, tgt_cls_flat, src_boxes, tgt_boxes, eos_coef, num_boxes)
    total_loss = (loss_ce * weight_dict["loss_ce"]
                  + loss_bbox * weight_dict["loss_bbox"]
                  + loss_giou * weight_dict["loss_giou"])
    jax.block_until_ready((loss_ce, loss_bbox, loss_giou, total_loss))

    # ---- sanity check against pure-JAX reference ----
    r_ce, r_bbox, r_giou = jax_reference(
        logits_flat, tgt_cls_flat, empty_weight, src_boxes, tgt_boxes, num_boxes)
    np.testing.assert_allclose(float(loss_ce), float(r_ce), rtol=1e-4, atol=1e-5)
    np.testing.assert_allclose(float(loss_bbox), float(r_bbox), rtol=1e-4, atol=1e-5)
    np.testing.assert_allclose(float(loss_giou), float(r_giou), rtol=1e-4, atol=1e-5)

    print("KERNEL_OK")
</pallas_src>

<mosaic_0001>
module attributes {stable_mosaic.version = 11 : i64} {
  func.func @owlvit_loss_kernel(%arg0: i32, %arg1: i32, %arg2: memref<32x128xf32, #tpu.memory_space<vmem>>, %arg3: memref<1x128xi32, #tpu.memory_space<vmem>>, %arg4: memref<8x128xf32, #tpu.memory_space<vmem>>, %arg5: memref<2xf32, #tpu.memory_space<smem>>, %arg6: memref<8x128xf32, #tpu.memory_space<vmem>>, %arg7: memref<2x128xf32, #tpu.memory_space<vmem>>) attributes {dimension_semantics = [#tpu.dimension_semantics<parallel>, #tpu.dimension_semantics<arbitrary>], iteration_bounds = array<i64: 2, 1>, scalar_prefetch = 0 : i64, scratch_operands = 1 : i64, tpu.core_type = #tpu.core_type<tc>, window_params = [{transform_indices = @transform_0, window_bounds = array<i64: 32, 128>}, {transform_indices = @transform_1, window_bounds = array<i64: 1, 128>}, {pipeline_mode = #tpu.pipeline_mode<synchronous>, transform_indices = @transform_2, window_bounds = array<i64: 8, 128>}, {transform_indices = @transform_3, window_bounds = array<i64: 2>}, {transform_indices = @transform_4, window_bounds = array<i64: 8, 128>}]} {
    %c0_i32 = arith.constant 0 : i32
    %0 = arith.cmpi eq, %arg1, %c0_i32 : i32
    %1 = arith.extui %0 : i1 to i32
    %c0_i32_0 = arith.constant 0 : i32
    %2 = arith.cmpi ne, %1, %c0_i32_0 : i32
    scf.if %2 {
      %cst_18 = arith.constant 0.000000e+00 : f32
      %39 = vector.broadcast %cst_18 : f32 to vector<2x128xf32>
      %c0_19 = arith.constant 0 : index
      %c0_20 = arith.constant 0 : index
      %40 = vector.load %arg7[%c0_19, %c0_20] : memref<2x128xf32, #tpu.memory_space<vmem>>, vector<2x128xf32>
      tpu.vector_store %arg7[%c0_19, %c0_20], %39 {strides = array<i32>} : memref<2x128xf32, #tpu.memory_space<vmem>>, vector<2x128xf32>,
    } else {
    }
    %c0 = arith.constant 0 : index
    %c0_1 = arith.constant 0 : index
    %3 = vector.load %arg2[%c0, %c0_1] : memref<32x128xf32, #tpu.memory_space<vmem>>, vector<32x128xf32>
    %c0_2 = arith.constant 0 : index
    %c0_3 = arith.constant 0 : index
    %4 = vector.load %arg3[%c0_2, %c0_3] : memref<1x128xi32, #tpu.memory_space<vmem>>, vector<1x128xi32>
    %c0_4 = arith.constant 0 : index
    %5 = memref.load %arg5[%c0_4] : memref<2xf32, #tpu.memory_space<smem>>
    %cst = arith.constant dense<0xFF800000> : vector<128xf32>
    %6 = vector.multi_reduction <maximumf>, %3, %cst [0] : vector<32x128xf32> to vector<128xf32>
    %7 = vector.shape_cast %6 : vector<128xf32> to vector<1x128xf32>
    %8 = vector.broadcast %7 : vector<1x128xf32> to vector<32x128xf32>
    %9 = arith.subf %3, %8 : vector<32x128xf32>
    %10 = math.exp %9 : vector<32x128xf32>
    %cst_5 = arith.constant dense<0.000000e+00> : vector<128xf32>
    %11 = vector.multi_reduction <add>, %10, %cst_5 [0] : vector<32x128xf32> to vector<128xf32>
    %12 = vector.shape_cast %11 : vector<128xf32> to vector<1x128xf32>
    %13 = math.log %12 : vector<1x128xf32>
    %14 = tpu.iota {dimensions = array<i32: 0>} : vector<32x128xi32>
    %15 = vector.broadcast %4 : vector<1x128xi32> to vector<32x128xi32>
    %16 = arith.cmpi eq, %14, %15 : vector<32x128xi32>
    %cst_6 = arith.constant 0.000000e+00 : f32
    %17 = vector.broadcast %cst_6 : f32 to vector<32x128xf32>
    %18 = arith.select %16, %9, %17 : vector<32x128xi1>, vector<32x128xf32>
    %cst_7 = arith.constant dense<0.000000e+00> : vector<128xf32>
    %19 = vector.multi_reduction <add>, %18, %cst_7 [0] : vector<32x128xf32> to vector<128xf32>
    %20 = vector.shape_cast %19 : vector<128xf32> to vector<1x128xf32>
    %21 = arith.subf %13, %20 : vector<1x128xf32>
    %c0_i32_8 = arith.constant 0 : i32
    %22 = vector.broadcast %c0_i32_8 : i32 to vector<1x128xi32>
    %23 = arith.cmpi slt, %4, %22 : vector<1x128xi32>
    %c0_i32_9 = arith.constant 0 : i32
    %24 = vector.broadcast %c0_i32_9 : i32 to vector<1x128xi32>
    %25 = arith.cmpi eq, %4, %24 : vector<1x128xi32>
    %cst_10 = arith.constant 1.000000e+00 : f32
    %26 = vector.broadcast %5 : f32 to vector<1x128xf32>
    %27 = vector.broadcast %cst_10 : f32 to vector<1x128xf32>
    %28 = arith.select %25, %26, %27 : vector<1x128xi1>, vector<1x128xf32>
    %cst_11 = arith.constant 0.000000e+00 : f32
    %29 = vector.broadcast %cst_11 : f32 to vector<1x128xf32>
    %30 = arith.select %23, %29, %28 : vector<1x128xi1>, vector<1x128xf32>
    %c0_12 = arith.constant 0 : index
    %c0_13 = arith.constant 0 : index
    %31 = vector.load %arg7[%c0_12, %c0_13] : memref<2x128xf32, #tpu.memory_space<vmem>>, vector<2x128xf32>
    %32 = arith.mulf %30, %21 : vector<1x128xf32>
    %33 = tpu.concatenate %32, %30 in 0 : vector<1x128xf32>, vector<1x128xf32> -> vector<2x128xf32>
    %34 = arith.addf %31, %33 : vector<2x128xf32>
    %c0_14 = arith.constant 0 : index
    %c0_15 = arith.constant 0 : index
    %35 = vector.load %arg7[%c0_14, %c0_15] : memref<2x128xf32, #tpu.memory_space<vmem>>, vector<2x128xf32>
    tpu.vector_store %arg7[%c0_14, %c0_15], %34 {strides = array<i32>} : memref<2x128xf32, #tpu.memory_space<vmem>>, vector<2x128xf32>,
    %c0_i32_16 = arith.constant 0 : i32
    %36 = arith.cmpi eq, %arg1, %c0_i32_16 : i32
    %37 = arith.extui %36 : i1 to i32
    %c0_i32_17 = arith.constant 0 : i32
    %38 = arith.cmpi ne, %37, %c0_i32_17 : i32
    scf.if %38 {
      %c0_18 = arith.constant 0 : index
      %c0_19 = arith.constant 0 : index
      %39 = vector.load %arg7[%c0_18, %c0_19] : memref<2x128xf32, #tpu.memory_space<vmem>>, vector<2x128xf32>
      %cst_20 = arith.constant dense<0.000000e+00> : vector<2xf32>
      %40 = vector.multi_reduction <add>, %39, %cst_20 [1] : vector<2x128xf32> to vector<2xf32>
      %41 = vector.shape_cast %40 : vector<2xf32> to vector<2x1xf32>
      %42 = vector.extract_strided_slice %41 {offsets = [0, 0], sizes = [1, 1], strides = [1, 1]} : vector<2x1xf32> to vector<1x1xf32>
      %43 = vector.extract_strided_slice %41 {offsets = [1, 0], sizes = [1, 1], strides = [1, 1]} : vector<2x1xf32> to vector<1x1xf32>
      %c1 = arith.constant 1 : index
      %44 = memref.load %arg5[%c1] : memref<2xf32, #tpu.memory_space<smem>>
      %c0_21 = arith.constant 0 : index
      %c0_22 = arith.constant 0 : index
      %45 = vector.load %arg4[%c0_21, %c0_22] : memref<8x128xf32, #tpu.memory_space<vmem>>, vector<8x128xf32>
      %46 = vector.extract_strided_slice %45 {offsets = [0, 0], sizes = [4, 128], strides = [1, 1]} : vector<8x128xf32> to vector<4x128xf32>
      %47 = vector.extract_strided_slice %45 {offsets = [4, 0], sizes = [4, 128], strides = [1, 1]} : vector<8x128xf32> to vector<4x128xf32>
      %48 = arith.subf %46, %47 : vector<4x128xf32>
      %49 = math.absf %48 : vector<4x128xf32>
      %50 = vector.shape_cast %49 : vector<4x128xf32> to vector<1x4x128xf32>
      %cst_23 = arith.constant dense<0.000000e+00> : vector<1xf32>
      %51 = vector.multi_reduction <add>, %50, %cst_23 [1, 2] : vector<1x4x128xf32> to vector<1xf32>
      %52 = vector.shape_cast %51 : vector<1xf32> to vector<1x1x1xf32>
      %53 = vector.extract %52[0, 0, 0] : f32 from vector<1x1x1xf32>
      %54 = vector.broadcast %53 : f32 to vector<1x1xf32>
      %55 = vector.broadcast %44 : f32 to vector<1x1xf32>
      %56 = arith.divf %54, %55 : vector<1x1xf32>
      %57 = vector.extract_strided_slice %45 {offsets = [0, 0], sizes = [1, 128], strides = [1, 1]} : vector<8x128xf32> to vector<1x128xf32>
      %58 = vector.extract_strided_slice %45 {offsets = [1, 0], sizes = [1, 128], strides = [1, 1]} : vector<8x128xf32> to vector<1x128xf32>
      %59 = vector.extract_strided_slice %45 {offsets = [2, 0], sizes = [1, 128], strides = [1, 1]} : vector<8x128xf32> to vector<1x128xf32>
      %60 = vector.extract_strided_slice %45 {offsets = [3, 0], sizes = [1, 128], strides = [1, 1]} : vector<8x128xf32> to vector<1x128xf32>
      %61 = vector.extract_strided_slice %45 {offsets = [4, 0], sizes = [1, 128], strides = [1, 1]} : vector<8x128xf32> to vector<1x128xf32>
      %62 = vector.extract_strided_slice %45 {offsets = [5, 0], sizes = [1, 128], strides = [1, 1]} : vector<8x128xf32> to vector<1x128xf32>
      %63 = vector.extract_strided_slice %45 {offsets = [6, 0], sizes = [1, 128], strides = [1, 1]} : vector<8x128xf32> to vector<1x128xf32>
      %64 = vector.extract_strided_slice %45 {offsets = [7, 0], sizes = [1, 128], strides = [1, 1]} : vector<8x128xf32> to vector<1x128xf32>
      %cst_24 = arith.constant 5.000000e-01 : f32
      %65 = vector.broadcast %cst_24 : f32 to vector<1x128xf32>
      %66 = arith.mulf %65, %59 : vector<1x128xf32>
      %67 = arith.subf %57, %66 : vector<1x128xf32>
      %cst_25 = arith.constant 5.000000e-01 : f32
      %68 = vector.broadcast %cst_25 : f32 to vector<1x128xf32>
      %69 = arith.mulf %68, %60 : vector<1x128xf32>
      %70 = arith.subf %58, %69 : vector<1x128xf32>
      %cst_26 = arith.constant 5.000000e-01 : f32
      %71 = vector.broadcast %cst_26 : f32 to vector<1x128xf32>
      %72 = arith.mulf %71, %59 : vector<1x128xf32>
      %73 = arith.addf %57, %72 : vector<1x128xf32>
      %cst_27 = arith.constant 5.000000e-01 : f32
      %74 = vector.broadcast %cst_27 : f32 to vector<1x128xf32>
      %75 = arith.mulf %74, %60 : vector<1x128xf32>
      %76 = arith.addf %58, %75 : vector<1x128xf32>
      %cst_28 = arith.constant 5.000000e-01 : f32
      %77 = vector.broadcast %cst_28 : f32 to vector<1x128xf32>
      %78 = arith.mulf %77, %63 : vector<1x128xf32>
      %79 = arith.subf %61, %78 : vector<1x128xf32>
      %cst_29 = arith.constant 5.000000e-01 : f32
      %80 = vector.broadcast %cst_29 : f32 to vector<1x128xf32>
      %81 = arith.mulf %80, %64 : vector<1x128xf32>
      %82 = arith.subf %62, %81 : vector<1x128xf32>
      %cst_30 = arith.constant 5.000000e-01 : f32
      %83 = vector.broadcast %cst_30 : f32 to vector<1x128xf32>
      %84 = arith.mulf %83, %63 : vector<1x128xf32>
      %85 = arith.addf %61, %84 : vector<1x128xf32>
      %cst_31 = arith.constant 5.000000e-01 : f32
      %86 = vector.broadcast %cst_31 : f32 to vector<1x128xf32>
      %87 = arith.mulf %86, %64 : vector<1x128xf32>
      %88 = arith.addf %62, %87 : vector<1x128xf32>
      %89 = arith.maximumf %67, %79 : vector<1x128xf32>
      %90 = arith.maximumf %70, %82 : vector<1x128xf32>
      %91 = arith.minimumf %73, %85 : vector<1x128xf32>
      %92 = arith.minimumf %76, %88 : vector<1x128xf32>
      %93 = arith.subf %91, %89 : vector<1x128xf32>
      %cst_32 = arith.constant 0.000000e+00 : f32
      %94 = vector.broadcast %cst_32 : f32 to vector<1x128xf32>
      %95 = arith.maximumf %93, %94 : vector<1x128xf32>
      %96 = arith.subf %92, %90 : vector<1x128xf32>
      %cst_33 = arith.constant 0.000000e+00 : f32
      %97 = vector.broadcast %cst_33 : f32 to vector<1x128xf32>
      %98 = arith.maximumf %96, %97 : vector<1x128xf32>
      %99 = arith.mulf %95, %98 : vector<1x128xf32>
      %100 = arith.subf %73, %67 : vector<1x128xf32>
      %cst_34 = arith.constant 0.000000e+00 : f32
      %101 = vector.broadcast %cst_34 : f32 to vector<1x128xf32>
      %102 = arith.maximumf %100, %101 : vector<1x128xf32>
      %103 = arith.subf %76, %70 : vector<1x128xf32>
      %cst_35 = arith.constant 0.000000e+00 : f32
      %104 = vector.broadcast %cst_35 : f32 to vector<1x128xf32>
      %105 = arith.maximumf %103, %104 : vector<1x128xf32>
      %106 = arith.mulf %102, %105 : vector<1x128xf32>
      %107 = arith.subf %85, %79 : vector<1x128xf32>
      %cst_36 = arith.constant 0.000000e+00 : f32
      %108 = vector.broadcast %cst_36 : f32 to vector<1x128xf32>
      %109 = arith.maximumf %107, %108 : vector<1x128xf32>
      %110 = arith.subf %88, %82 : vector<1x128xf32>
      %cst_37 = arith.constant 0.000000e+00 : f32
      %111 = vector.broadcast %cst_37 : f32 to vector<1x128xf32>
      %112 = arith.maximumf %110, %111 : vector<1x128xf32>
      %113 = arith.mulf %109, %112 : vector<1x128xf32>
      %114 = arith.addf %106, %113 : vector<1x128xf32>
      %115 = arith.subf %114, %99 : vector<1x128xf32>
      %116 = arith.divf %99, %115 : vector<1x128xf32>
      %117 = arith.minimumf %67, %79 : vector<1x128xf32>
      %118 = arith.minimumf %70, %82 : vector<1x128xf32>
      %119 = arith.maximumf %73, %85 : vector<1x128xf32>
      %120 = arith.maximumf %76, %88 : vector<1x128xf32>
      %121 = arith.subf %119, %117 : vector<1x128xf32>
      %cst_38 = arith.constant 0.000000e+00 : f32
      %122 = vector.broadcast %cst_38 : f32 to vector<1x128xf32>
      %123 = arith.maximumf %121, %122 : vector<1x128xf32>
      %124 = arith.subf %120, %118 : vector<1x128xf32>
      %cst_39 = arith.constant 0.000000e+00 : f32
      %125 = vector.broadcast %cst_39 : f32 to vector<1x128xf32>
      %126 = arith.maximumf %124, %125 : vector<1x128xf32>
      %127 = arith.mulf %123, %126 : vector<1x128xf32>
      %128 = arith.subf %127, %115 : vector<1x128xf32>
      %129 = arith.divf %128, %127 : vector<1x128xf32>
      %130 = arith.subf %116, %129 : vector<1x128xf32>
      %cst_40 = arith.constant 1.000000e+00 : f32
      %131 = vector.broadcast %cst_40 : f32 to vector<1x128xf32>
      %132 = arith.subf %131, %130 : vector<1x128xf32>
      %133 = vector.shape_cast %132 : vector<1x128xf32> to vector<1x1x128xf32>
      %cst_41 = arith.constant dense<0.000000e+00> : vector<1xf32>
      %134 = vector.multi_reduction <add>, %133, %cst_41 [1, 2] : vector<1x1x128xf32> to vector<1xf32>
      %135 = vector.shape_cast %134 : vector<1xf32> to vector<1x1x1xf32>
      %136 = vector.extract %135[0, 0, 0] : f32 from vector<1x1x1xf32>
      %137 = vector.broadcast %136 : f32 to vector<1x1xf32>
      %138 = vector.broadcast %44 : f32 to vector<1x1xf32>
      %139 = arith.divf %137, %138 : vector<1x1xf32>
      %140 = tpu.iota {dimensions = array<i32: 0>} : vector<8x128xi32>
      %141 = tpu.iota {dimensions = array<i32: 1>} : vector<8x128xi32>
      %c0_i32_42 = arith.constant 0 : i32
      %142 = vector.broadcast %c0_i32_42 : i32 to vector<8x128xi32>
      %143 = arith.cmpi eq, %140, %142 : vector<8x128xi32>
      %c0_i32_43 = arith.constant 0 : i32
      %144 = vector.broadcast %c0_i32_43 : i32 to vector<8x128xi32>
      %145 = arith.cmpi eq, %141, %144 : vector<8x128xi32>
      %146 = arith.andi %143, %145 : vector<8x128xi1>
      %cst_44 = arith.constant 0.000000e+00 : f32
      %147 = vector.shape_cast %42 : vector<1x1xf32> to vector<1x1xf32>
      %148 = vector.broadcast %147 : vector<1x1xf32> to vector<8x128xf32>
      %149 = vector.broadcast %cst_44 : f32 to vector<8x128xf32>
      %150 = arith.select %146, %148, %149 : vector<8x128xi1>, vector<8x128xf32>
      %c1_i32 = arith.constant 1 : i32
      %151 = vector.broadcast %c1_i32 : i32 to vector<8x128xi32>
      %152 = arith.cmpi eq, %141, %151 : vector<8x128xi32>
      %153 = arith.andi %143, %152 : vector<8x128xi1>
      %cst_45 = arith.constant 0.000000e+00 : f32
      %154 = vector.shape_cast %43 : vector<1x1xf32> to vector<1x1xf32>
      %155 = vector.broadcast %154 : vector<1x1xf32> to vector<8x128xf32>
      %156 = vector.broadcast %cst_45 : f32 to vector<8x128xf32>
      %157 = arith.select %153, %155, %156 : vector<8x128xi1>, vector<8x128xf32>
      %158 = arith.addf %150, %157 : vector<8x128xf32>
      %c2_i32 = arith.constant 2 : i32
      %159 = vector.broadcast %c2_i32 : i32 to vector<8x128xi32>
      %160 = arith.cmpi eq, %141, %159 : vector<8x128xi32>
      %161 = arith.andi %143, %160 : vector<8x128xi1>
      %cst_46 = arith.constant 0.000000e+00 : f32
      %162 = vector.shape_cast %56 : vector<1x1xf32> to vector<1x1xf32>
      %163 = vector.broadcast %162 : vector<1x1xf32> to vector<8x128xf32>
      %164 = vector.broadcast %cst_46 : f32 to vector<8x128xf32>
      %165 = arith.select %161, %163, %164 : vector<8x128xi1>, vector<8x128xf32>
      %166 = arith.addf %158, %165 : vector<8x128xf32>
      %c3_i32 = arith.constant 3 : i32
      %167 = vector.broadcast %c3_i32 : i32 to vector<8x128xi32>
      %168 = arith.cmpi eq, %141, %167 : vector<8x128xi32>
      %169 = arith.andi %143, %168 : vector<8x128xi1>
      %cst_47 = arith.constant 0.000000e+00 : f32
      %170 = vector.shape_cast %139 : vector<1x1xf32> to vector<1x1xf32>
      %171 = vector.broadcast %170 : vector<1x1xf32> to vector<8x128xf32>
      %172 = vector.broadcast %cst_47 : f32 to vector<8x128xf32>
      %173 = arith.select %169, %171, %172 : vector<8x128xi1>, vector<8x128xf32>
      %174 = arith.addf %166, %173 : vector<8x128xf32>
      %c0_48 = arith.constant 0 : index
      %c0_49 = arith.constant 0 : index
      %175 = vector.load %arg6[%c0_48, %c0_49] : memref<8x128xf32, #tpu.memory_space<vmem>>, vector<8x128xf32>
      tpu.vector_store %arg6[%c0_48, %c0_49], %174 {strides = array<i32>} : memref<8x128xf32, #tpu.memory_space<vmem>>, vector<8x128xf32>,
    } else {
    }
    return
  }
  func.func @transform_0(%arg0: i32, %arg1: i32) -> (i32, i32) {
    %c1_i32 = arith.constant 1 : i32
    %0 = arith.muli %arg0, %c1_i32 : i32
    %1 = arith.addi %0, %arg1 : i32
    %c0_i32 = arith.constant 0 : i32
    %c0_i32_0 = arith.constant 0 : i32
    return %c0_i32, %1 : i32, i32
  }
  func.func @transform_1(%arg0: i32, %arg1: i32) -> (i32, i32) {
    %c1_i32 = arith.constant 1 : i32
    %0 = arith.muli %arg0, %c1_i32 : i32
    %1 = arith.addi %0, %arg1 : i32
    %c0_i32 = arith.constant 0 : i32
    %c0_i32_0 = arith.constant 0 : i32
    return %c0_i32, %1 : i32, i32
  }
  func.func @transform_2(%arg0: i32, %arg1: i32) -> (i32, i32) {
    %c0_i32 = arith.constant 0 : i32
    %c0_i32_0 = arith.constant 0 : i32
    %c0_i32_1 = arith.constant 0 : i32
    return %c0_i32, %c0_i32_0 : i32, i32
  }
  func.func @transform_3(%arg0: i32, %arg1: i32) -> i32 {
    %c0_i32 = arith.constant 0 : i32
    %c0_i32_0 = arith.constant 0 : i32
    return %c0_i32 : i32
  }
  func.func @transform_4(%arg0: i32, %arg1: i32) -> (i32, i32) {
    %c0_i32 = arith.constant 0 : i32
    %c0_i32_0 = arith.constant 0 : i32
    return %arg0, %c0_i32 : i32, i32
  }
}

</mosaic_0001>

<llo_original>
// kernel: tpu_custom_call.1
$region0: #{tpu_custom_call.1}
  #allocation0 [shape = 'u32[]', space=smem, size = 0x4, offset = 0x4, fixed_abs, tag = 'smem constant byte address 0x4 - core index']
  #allocation1 [shape = 'u32[72,128]{1,0:T(1,128)}', space=vmem, size = 0x9000, scoped, tag = 'internal scratch']
  #allocation2 [shape = 'f32[2,128]{1,0:T(2,128)}', space=vmem, size = 0x400, scoped, tag = 'scratch operand']
  %s0 = inlined_call_operand.hbm [shape: f32[32,256], index: 0, kind: input, shape index: {}]
  %s1 = inlined_call_operand.hbm [shape: s32[1,256], index: 1, kind: input, shape index: {}]
  %s2 = inlined_call_operand.hbm [shape: f32[8,128], index: 2, kind: input, shape index: {}]
  %s3 = inlined_call_operand.vmem [shape: f32[2], index: 3, kind: input, shape index: {}]
  %s4 = inlined_call_operand.hbm [shape: f32[16,128], index: 4, kind: output, shape index: {}]
  %s5 = sld [smem:[#allocation0]]
  $region73: #{tpu_custom_call.1} parent=0
    _
  %s7 = ssub.s32 1, %s5
  %s8 = scalar_select 0, %s7, %s5
  $region1: #{tpu_custom_call.1} parent=0
    #allocation3 [shape = 'u8[32768]{0}', space=vmem, size = 0x8000, scoped, tag = 'input window, operand 0']
    #allocation4 [shape = 's32[2]{0}', space=sflag, size = 0x8, scoped, tag = 'scoped memory for tpu_custom_call.1']
    #allocation5 [shape = 's32[2]{0}', space=sflag, size = 0x8, scoped, tag = 'scoped memory for tpu_custom_call.1']
    #allocation6 [shape = 's32[2]{0}', space=sflag, size = 0x8, scoped, tag = 'scoped memory for tpu_custom_call.1']
    #allocation7 [shape = 'u8[1024]{0}', space=vmem, size = 0x400, scoped, tag = 'input window, operand 1']
    #allocation8 [shape = 's32[2]{0}', space=sflag, size = 0x8, scoped, tag = 'scoped memory for tpu_custom_call.1']
    #allocation9 [shape = 'u8[4096]{0}', space=vmem, size = 0x1000, scoped, tag = 'input window, operand 2, single buffered']
    #allocation10 [shape = 'u8[512]{0}', space=smem, size = 0x200, scoped, tag = 'input window, operand 3, single buffered']
    #allocation11 [shape = 'u8[8192]{0}', space=vmem, size = 0x2000, scoped, tag = 'output window, operand 0']
    %9 = vsyncpa [#allocation4], 0
    %s10 = scalar_lea.sflag [#allocation4], 1
    %11 = vsyncpa %s10, 0
    %12 = vsyncpa [#allocation8], 0
    %s13 = scalar_lea.sflag [#allocation8], 1
    %14 = vsyncpa %s13, 0
    %15 = vsyncpa [#allocation6], 0
    %16 = vsyncpa [#allocation5], 0
    %s17 = scalar_lea.sflag [#allocation5], 1
    %18 = vsyncpa %s17, 0
    loop: start=0, step=1, limit=4
    $region2: #{tpu_custom_call.1} parent=1 // loop_pre_header
      _
    $region3: #{tpu_custom_call.1} parent=1 // loop_header
      %s20 = sphi 0, %s24
      %p21 = scmp.ge.s32.totalorder %s20, 4
      %s27 = sphi 0, %s39
      %s28 = sphi 0, %s35
      %s29 = sphi 0, %s27
      %s30 = sphi 0, %s28
      %s31 = sphi 0, %s29
      %s32 = sphi 0, %s30
      %s44 = sphi 0, %s46
      %s47 = sphi 0, %s44
      %s48 = sphi 0, %s47
      %s64 = sphi 0, %s48
      %s72 = sphi 0, %s74
      %s75 = sphi 0, %s72
      %s76 = sphi 0, %s75
      %s92 = sphi 0, %s76
      %s96 = sphi 0, %s96
      %s98 = sphi 0, %s96
      %s99 = sphi 0, %s98
      %s113 = sphi 0, %s99
      %s117 = sphi 0, %s117
      %s119 = sphi 0, %s117
      %s120 = sphi 0, %s119
      %s134 = sphi 0, %s120
      %s140 = sphi 0, %s142
      %s143 = sphi 0, %s140
      %s144 = sphi 0, %s143
      %s160 = sphi 0, %s144
    $region4: #{tpu_custom_call.1} parent=1 // loop_header_branch
      %23 = sbr.rel (%p21) target = $region8
    $region5: #{tpu_custom_call.1} parent=1 // loop_body
      %s25 = ssub.s32 %s20, 1
      %s26 = ssub.s32 %s20, 2
      %s33 = sadd.s32 1, %s28
      %p34 = scmp.ge.s32.totalorder %s33, 1
      %s35 = scalar_select %p34, 0, %s33
      %s36 = sadd.s32 1, %s27
      %s37 = scalar_select %p34, %s36, %s27
      %p38 = scmp.ge.s32.totalorder %s37, 2
      %s39 = scalar_select %p38, 0, %s37
      %s40 = sadd.s32 %s27, %s28
      %s41 = sadd.s32 %s39, %s35
      %s42 = ssub.s32 %s40, %s41
      %p43 = scmp.eq.s32.totalorder %s42, 0
      %s45 = sadd.s32 %s44, 1
      %s46 = scalar_select %p43, %s44, %s45
      %p49 = pneg %p43
      %p50 = scmp.eq.s32.totalorder %s20, 1
      %p51 = por %p49, %p50
      %p52 = scmp.ne.s32.totalorder %s44, %s47
      %p53 = scmp.eq.s32.totalorder %s20, 0
      %p54 = por %p52, %p53
      %p55 = scmp.ne.s32.totalorder %s44, %s47
      %p56 = scmp.eq.s32.totalorder %s25, 1
      %p57 = por %p55, %p56
      %p58 = scmp.ne.s32.totalorder %s47, %s48
      %p59 = scmp.eq.s32.totalorder %s25, 0
      %p60 = por %p58, %p59
      %p61 = scmp.ne.s32.totalorder %s47, %s48
      %p62 = scmp.eq.s32.totalorder %s26, 1
      %p63 = por %p61, %p62
      %p65 = scmp.ne.s32.totalorder %s48, %s64
      %p66 = scmp.eq.s32.totalorder %s26, 0
      %p67 = por %p65, %p66
      %s68 = sadd.s32 %s27, %s28
      %s69 = sadd.s32 %s39, %s35
      %s70 = ssub.s32 %s68, %s69
      %p71 = scmp.eq.s32.totalorder %s70, 0
      %s73 = sadd.s32 %s72, 1
      %s74 = scalar_select %p71, %s72, %s73
      %p77 = pneg %p71
      %p78 = scmp.eq.s32.totalorder %s20, 1
      %p79 = por %p77, %p78
      %p80 = scmp.ne.s32.totalorder %s72, %s75
      %p81 = scmp.eq.s32.totalorder %s20, 0
      %p82 = por %p80, %p81
      %p83 = scmp.ne.s32.totalorder %s72, %s75
      %p84 = scmp.eq.s32.totalorder %s25, 1
      %p85 = por %p83, %p84
      %p86 = scmp.ne.s32.totalorder %s75, %s76
      %p87 = scmp.eq.s32.totalorder %s25, 0
      %p88 = por %p86, %p87
      %p89 = scmp.ne.s32.totalorder %s75, %s76
      %p90 = scmp.eq.s32.totalorder %s26, 1
      %p91 = por %p89, %p90
      %p93 = scmp.ne.s32.totalorder %s76, %s92
      %p94 = scmp.eq.s32.totalorder %s26, 0
      %p95 = por %p93, %p94
      %s97 = sadd.s32 %s96, 1
      %p100 = scmp.eq.s32.totalorder %s20, 1
      %p101 = scmp.ne.s32.totalorder %s96, %s98
      %p102 = scmp.eq.s32.totalorder %s20, 0
      %p103 = por %p101, %p102
      %p104 = scmp.ne.s32.totalorder %s96, %s98
      %p105 = scmp.eq.s32.totalorder %s25, 1
      %p106 = por %p104, %p105
      %p107 = scmp.ne.s32.totalorder %s98, %s99
      %p108 = scmp.eq.s32.totalorder %s25, 0
      %p109 = por %p107, %p108
      %p110 = scmp.ne.s32.totalorder %s98, %s99
      %p111 = scmp.eq.s32.totalorder %s26, 1
      %p112 = por %p110, %p111
      %p114 = scmp.ne.s32.totalorder %s99, %s113
      %p115 = scmp.eq.s32.totalorder %s26, 0
      %p116 = por %p114, %p115
      %s118 = sadd.s32 %s117, 1
      %p121 = scmp.eq.s32.totalorder %s20, 1
      %p122 = scmp.ne.s32.totalorder %s117, %s119
      %p123 = scmp.eq.s32.totalorder %s20, 0
      %p124 = por %p122, %p123
      %p125 = scmp.ne.s32.totalorder %s117, %s119
      %p126 = scmp.eq.s32.totalorder %s25, 1
      %p127 = por %p125, %p126
      %p128 = scmp.ne.s32.totalorder %s119, %s120
      %p129 = scmp.eq.s32.totalorder %s25, 0
      %p130 = por %p128, %p129
      %p131 = scmp.ne.s32.totalorder %s119, %s120
      %p132 = scmp.eq.s32.totalorder %s26, 1
      %p133 = por %p131, %p132
      %p135 = scmp.ne.s32.totalorder %s120, %s134
      %p136 = scmp.eq.s32.totalorder %s26, 0
      %p137 = por %p135, %p136
      %s138 = ssub.s32 %s27, %s39
      %p139 = scmp.eq.s32.totalorder %s138, 0
      %s141 = sadd.s32 %s140, 1
      %s142 = scalar_select %p139, %s140, %s141
      %p145 = pneg %p139
      %p146 = scmp.eq.s32.totalorder %s20, 1
      %p147 = por %p145, %p146
      %p148 = scmp.ne.s32.totalorder %s140, %s143
      %p149 = scmp.eq.s32.totalorder %s20, 0
      %p150 = por %p148, %p149
      %p151 = scmp.ne.s32.totalorder %s140, %s143
      %p152 = scmp.eq.s32.totalorder %s25, 1
      %p153 = por %p151, %p152
      %p154 = scmp.ne.s32.totalorder %s143, %s144
      %p155 = scmp.eq.s32.totalorder %s25, 0
      %p156 = por %p154, %p155
      %p157 = scmp.ne.s32.totalorder %s143, %s144
      %p158 = scmp.eq.s32.totalorder %s26, 1
      %p159 = por %p157, %p158
      %p161 = scmp.ne.s32.totalorder %s144, %s160
      %p162 = scmp.eq.s32.totalorder %s26, 0
      %p163 = por %p161, %p162
      %p164 = scmp.le.s32.totalorder 1, %s20
      %p165 = scmp.lt.s32.totalorder %s20, 3
      %p166 = pnand %p164, %p165
      %p167 = pneg %p166
      // Predicated region
      $region9: #{tpu_custom_call.1} parent=5 // pred_check
        _
      $region10: #{tpu_custom_call.1} parent=5 // pred_check_branch
        %169 = sbr.rel (%p166) target = $region12
      $region11: #{tpu_custom_call.1} parent=5 // pred_region
        %s170 = ssub.s32 %s20, 1
        // Predicated region
        $region13: #{tpu_custom_call.1} parent=11 // pred_check
          %p171 = pneg %p109
        $region14: #{tpu_custom_call.1} parent=11 // pred_check_branch
          %173 = sbr.rel (%p171) target = $region16
        $region15: #{tpu_custom_call.1} parent=11 // pred_region
          %175 = vsyncadd [#allocation8], 0
          %s177 = sshll.u32 %s2, 4
          %s178 = int_to_ptr.hbm [resolvable:$true] %s177
          %s179 = sshll.u32 [#allocation9], 4
          %s180 = int_to_ptr.vmem [resolvable:$true] %s179
          %182 = dma.hbm_to_vmem [thread:$0]  %s178, 128, %s180, [#allocation8]
        $region16: #{tpu_custom_call.1} parent=11 // pred_fallthru
          _
        // Predicated region
        $region17: #{tpu_custom_call.1} parent=11 // pred_check
          %p183 = pneg %p130
        $region18: #{tpu_custom_call.1} parent=11 // pred_check_branch
          %185 = sbr.rel (%p183) target = $region20
        $region19: #{tpu_custom_call.1} parent=11 // pred_region
          %187 = vsyncadd [#allocation6], 0
          %s189 = sshll.u32 %s3, 4
          %s190 = int_to_ptr.vmem [resolvable:$true] %s189
          %192 = dma.vmem_to_smem %s190, 16, [#allocation10], [#allocation6]
        $region20: #{tpu_custom_call.1} parent=11 // pred_fallthru
          _
      $region12: #{tpu_custom_call.1} parent=5 // pred_fallthru
        _
      %p193 = scmp.lt.s32.totalorder %s20, 2
      // Predicated region
      $region21: #{tpu_custom_call.1} parent=5 // pred_check
        %p194 = pneg %p193
      $region22: #{tpu_custom_call.1} parent=5 // pred_check_branch
        %196 = sbr.rel (%p194) target = $region24
      $region23: #{tpu_custom_call.1} parent=5 // pred_region
        // Predicated region
        $region25: #{tpu_custom_call.1} parent=23 // pred_check
          %p197 = pneg %p54
        $region26: #{tpu_custom_call.1} parent=23 // pred_check_branch
          %199 = sbr.rel (%p197) target = $region28
        $region27: #{tpu_custom_call.1} parent=23 // pred_region
          %s200 = sand.u32 %s44, 1
          %s201 = scalar_lea.sflag [#allocation4], %s200
          %s202 = sand.u32 %s44, 1
          %s203 = smul.addr %s202, 32
          %s204 = scalar_lea.vmem [#allocation3], %s203
          %s205 = sadd.s32 %s27, %s28
          %207 = vsyncadd %s201, 0
          %s208 = smul.addr %s205, 8
          %s209 = scalar_lea.hbm %s0, %s208
          %s210 = sshll.u32 %s209, 4
          %s211 = int_to_ptr.hbm [resolvable:$true] %s210
          %s212 = sshll.u32 %s204, 4
          %s213 = int_to_ptr.vmem [resolvable:$true] %s212
          %218 = dma.hbm_to_vmem [thread:$0]  %s211, 512, %s213, %s201, 256, 128, 8
        $region28: #{tpu_custom_call.1} parent=23 // pred_fallthru
          _
        // Predicated region
        $region29: #{tpu_custom_call.1} parent=23 // pred_check
          %p219 = pneg %p82
        $region30: #{tpu_custom_call.1} parent=23 // pred_check_branch
          %221 = sbr.rel (%p219) target = $region32
        $region31: #{tpu_custom_call.1} parent=23 // pred_region
          %s222 = sand.u32 %s20, 1
          %s223 = scalar_lea.sflag [#allocation8], %s222
          %s224 = sand.u32 %s72, 1
          %s225 = scalar_lea.vmem [#allocation7], %s224
          %s226 = sadd.s32 %s27, %s28
          %228 = vsyncadd %s223, 0
          %s229 = scalar_lea.hbm %s1, %s226
          %s231 = sshll.u32 %s229, 4
          %s232 = int_to_ptr.hbm [resolvable:$true] %s231
          %s233 = sshll.u32 %s225, 4
          %s234 = int_to_ptr.vmem [resolvable:$true] %s233
          %236 = dma.hbm_to_vmem [thread:$0]  %s232, 16, %s234, %s223
        $region32: #{tpu_custom_call.1} parent=23 // pred_fallthru
          _
      $region24: #{tpu_custom_call.1} parent=5 // pred_fallthru
        _
      %p237 = scmp.le.s32.totalorder 1, %s20
      %p238 = scmp.lt.s32.totalorder %s20, 3
      %p239 = pnand %p237, %p238
      %p240 = pneg %p239
      // Predicated region
      $region33: #{tpu_custom_call.1} parent=5 // pred_check
        _
      $region34: #{tpu_custom_call.1} parent=5 // pred_check_branch
        %242 = sbr.rel (%p239) target = $region36
      $region35: #{tpu_custom_call.1} parent=5 // pred_region
        %s243 = ssub.s32 %s20, 1
        %s244 = sand.u32 %s47, 1
        %s245 = scalar_lea.sflag [#allocation4], %s244
        %s246 = sand.u32 %s47, 1
        %s247 = smul.addr %s246, 32
        %s248 = scalar_lea.vmem [#allocation3], %s247
        // Predicated region
        $region37: #{tpu_custom_call.1} parent=35 // pred_check
          %p249 = pneg %p60
        $region38: #{tpu_custom_call.1} parent=35 // pred_check_branch
          %251 = sbr.rel (%p249) target = $region40
        $region39: #{tpu_custom_call.1} parent=35 // pred_region
          %253 = dma.done %s245, 512
        $region40: #{tpu_custom_call.1} parent=35 // pred_fallthru
          _
        %s254 = sand.u32 %s25, 1
        %s255 = scalar_lea.sflag [#allocation8], %s254
        %s256 = sand.u32 %s75, 1
        %s257 = scalar_lea.vmem [#allocation7], %s256
        // Predicated region
        $region41: #{tpu_custom_call.1} parent=35 // pred_check
          %p258 = pneg %p88
        $region42: #{tpu_custom_call.1} parent=35 // pred_check_branch
          %260 = sbr.rel (%p258) target = $region44
        $region43: #{tpu_custom_call.1} parent=35 // pred_region
          %262 = dma.done %s255, 16
        $region44: #{tpu_custom_call.1} parent=35 // pred_fallthru
          _
        // Predicated region
        $region45: #{tpu_custom_call.1} parent=35 // pred_check
          %p263 = pneg %p109
        $region46: #{tpu_custom_call.1} parent=35 // pred_check_branch
          %265 = sbr.rel (%p263) target = $region48
        $region47: #{tpu_custom_call.1} parent=35 // pred_region
          %267 = dma.done [#allocation8], 128
        $region48: #{tpu_custom_call.1} parent=35 // pred_fallthru
          _
        // Predicated region
        $region49: #{tpu_custom_call.1} parent=35 // pred_check
          %p268 = pneg %p130
        $region50: #{tpu_custom_call.1} parent=35 // pred_check_branch
          %270 = sbr.rel (%p268) target = $region52
        $region51: #{tpu_custom_call.1} parent=35 // pred_region
          %272 = dma.done [#allocation6], 16
        $region52: #{tpu_custom_call.1} parent=35 // pred_fallthru
          _
        %273 = sfence
        %s274 = sand.u32 %s47, 1
        %s275 = scalar_lea.sflag [#allocation4], %s274
        %s276 = sand.u32 %s47, 1
        %s277 = smul.addr %s276, 32
        %s278 = scalar_lea.vmem [#allocation3], %s277
        %p279 = pneg %p60
        %p280 = pneg %p57
        %s281 = sand.u32 %s25, 1
        %s282 = scalar_lea.sflag [#allocation8], %s281
        %s283 = sand.u32 %s75, 1
        %s284 = scalar_lea.vmem [#allocation7], %s283
        %p285 = pneg %p88
        %p286 = pneg %p85
        %p287 = pneg %p109
        %p288 = pneg %p106
        %p289 = pneg %p130
        %p290 = pneg %p127
        %p291 = pneg %p156
        %p292 = pneg %p153
        %s293 = sand.u32 %s143, 1
        %s294 = scalar_lea.sflag [#allocation5], %s293
        %s295 = sand.u32 %s143, 1
        %s296 = smul.addr %s295, 8
        %s297 = scalar_lea.vmem [#allocation11], %s296
        %s298 = sadd.s32 %s29, %s30
        %s299 = sadd.s32 %s29, %s30
        %p300 = scmp.eq.s32.totalorder %s30, 0
        // Predicated region
        $region53: #{tpu_custom_call.1} parent=35 // pred_check
          %p301 = pneg %p300
        $region54: #{tpu_custom_call.1} parent=35 // pred_check_branch
          %303 = sbr.rel (%p301) target = $region56
        $region55: #{tpu_custom_call.1} parent=35 // pred_region
          %304 = vst [vmem:[#allocation2] sm:$0x3] 0.0
        $region56: #{tpu_custom_call.1} parent=35 // pred_fallthru
          _
        %v305 = vld [vmem:[%s248] sm:$0xff]
        %v306 = vld [vmem:[%s248 + $0x8] sm:$0xff]
        %v307 = vld [vmem:[%s248 + $0x10] sm:$0xff]
        %v308 = vld [vmem:[%s248 + $0x18] sm:$0xff]
        %v309 = vld [vmem:[%s257] sm:$0x1]
        %s310 = sld [smem:[#allocation10]]
        %v311 = vmax.f32 %v305, %v306
        %v312 = vmax.f32 %v307, %v308
        %v313 = vmax.f32 %v311, %v312
        %v314 = vrot.slane %v313, 4
        %v315 = vmax.f32 %v313, %v314
        %v316 = vrot.slane %v315, 2
        %v317 = vmax.f32 %v315, %v316
        %v318 = vrot.slane %v317, 1
        %v319 = vmax.f32 %v317, %v318
        %v320 = vsub.f32 %v305, %v319
        %v321 = vsub.f32 %v306, %v319
        %v322 = vsub.f32 %v307, %v319
        %v323 = vsub.f32 %v308, %v319
        %v324 = vmul.f32 %v320, 1.442695
        %v325 = vpow.pop %v324
        %v326 = vmul.f32 %v321, 1.442695
        %v327 = vpow.pop %v326
        %v328 = vmul.f32 %v322, 1.442695
        %v329 = vpow.pop %v328
        %v330 = vmul.f32 %v323, 1.442695
        %v331 = vpow.pop %v330
        %v332 = vadd.f32 %v325, %v327
        %v333 = vadd.f32 %v332, %v329
        %v334 = vadd.f32 %v333, %v331
        %v335 = vrot.slane %v334, 4
        %v336 = vadd.f32 %v334, %v335
        %v337 = vrot.slane %v336, 2
        %v338 = vadd.f32 %v336, %v337
        %v339 = vrot.slane %v338, 1
        %v340 = vadd.f32 %v338, %v339
        %v341 = vlog2.pop %v340
        %v342 = vmul.f32 %v341, 0.6931472
        %v343 = vlaneseq
        %v344 = vshrl.u32 %v343, 7
        %v345 = vadd.s32 %v344, 8
        %v346 = vadd.s32 %v344, 16
        %v347 = vadd.s32 %v344, 24
        %v348 = vperm.slane %v309, 0
        %vm349 = vcmp.eq.s32.totalorder %v344, %v348
        %vm350 = vcmp.eq.s32.totalorder %v345, %v348
        %vm351 = vcmp.eq.s32.totalorder %v346, %v348
        %vm352 = vcmp.eq.s32.totalorder %v347, %v348
        %v353 = vsel %vm349, %v320, 0.0
        %v354 = vsel %vm350, %v321, 0.0
        %v355 = vsel %vm351, %v322, 0.0
        %v356 = vsel %vm352, %v323, 0.0
        %v357 = vadd.f32 %v353, %v354
        %v358 = vadd.f32 %v357, %v355
        %v359 = vadd.f32 %v358, %v356
        %v360 = vrot.slane %v359, 4
        %v361 = vadd.f32 %v359, %v360
        %v362 = vrot.slane %v361, 2
        %v363 = vadd.f32 %v361, %v362
        %v364 = vrot.slane %v363, 1
        %v365 = vadd.f32 %v363, %v364
        %v366 = vsub.f32 %v342, %v365
        %vm367 = vcmp.lt.s32.totalorder %v309, 0
        %vm368 = vcmp.eq.s32.totalorder %v309, 0
        %v369 = vstv %s310
        %v370 = vsel %vm368, %v369, 1.0
        %v371 = vsel %vm367, 0.0, %v370
        %v372 = vld [vmem:[#allocation2] sm:$0x3]
        %v373 = vmul.f32 %v371, %v366
        %v375 = vperm.slane %v371, 0
        %vm377 = vcmask 1040384
        %v378 = vsel %vm377, %v373, %v375
        %v379 = vadd.f32 %v372, %v378
        %380 = vst [vmem:[#allocation2] sm:$0x3] %v379
        // Predicated region
        $region57: #{tpu_custom_call.1} parent=35 // pred_check
          %p381 = pneg %p300
        $region58: #{tpu_custom_call.1} parent=35 // pred_check_branch
          %383 = sbr.rel (%p381) target = $region60
        $region59: #{tpu_custom_call.1} parent=35 // pred_region
          %v384 = vld [vmem:[#allocation2] sm:$0x3]
          %vm385 = vcmask 1041408
          %v386 = vsel %vm385, %v384, 0.0
          %387 = vadd.xlane.f32.xlu0 %v386
          %v388 = vpop.xlane.xlu0 %387
          %s389 = sld [smem:[#allocation10 + $0x1]]
          %v390 = vld [vmem:[#allocation9] sm:$0xff]
          %v392 = vrot.slane %v390, 4
          %v394 = vsub.f32 %v390, %v392
          %v395 = vand.u32 2147483647, %v394
          %vm396 = vcmask 1043456
          %v397 = vsel %vm396, %v395, 0.0
          %398 = vadd.xlane.f32.xlu0 %v397
          %v399 = vpop.xlane.xlu0 %398
          %v400 = vrot.slane %v399, 4
          %v401 = vadd.f32 %v399, %v400
          %v402 = vrot.slane %v401, 2
          %v403 = vadd.f32 %v401, %v402
          %v404 = vrot.slane %v403, 1
          %v405 = vadd.f32 %v403, %v404
          %s406 = vtos %v405
          %v407 = vstv %s406
          %v408 = vstv %s389
          %v409 = vrcp.pop %v408
          %v410 = vmul.f32 %v408, %v409
          %v411 = vsub.f32 1.0, %v410
          %v412 = vmul.f32 %v409, %v411
          %v413 = vadd.f32 %v409, %v412
          %vm414 = vweird.f32 %v408
          %vm415 = vweird.f32 %v409
          %vm416 = vmor %vm414, %vm415
          %v417 = vsel %vm416, %v409, %v413
          %v418 = vand.u32 2147483647, %v408
          %vm419 = vcmp.eq.f32.partialorder %v418, 8.507059e+37
          %v420 = vand.u32 %v408, 2147483648
          %v421 = vor.u32 1.1754944e-38, %v420
          %v422 = vsel %vm419, %v421, %v417
          %v423 = vmul.f32 %v407, %v422
          %v424 = vmul.f32 %v390, 0.5
          %v426 = vrot.slane %v424, 2
          %v428 = vsub.f32 %v390, %v426
          %v429 = vadd.f32 %v390, %v426
          %v431 = vrot.slane %v428, 4
          %v433 = vmax.f32 %v428, %v431
          %v435 = vrot.slane %v429, 4
          %v437 = vmin.f32 %v429, %v435
          %v438 = vsub.f32 %v437, %v433
          %v439 = vmax.f32 %v438, 0.0
          %v441 = vrot.slane %v439, 1
          %v443 = vmul.f32 %v439, %v441
          %v444 = vsub.f32 %v429, %v428
          %v445 = vmax.f32 %v444, 0.0
          %v447 = vrot.slane %v445, 1
          %v449 = vmul.f32 %v445, %v447
          %v451 = vrot.slane %v449, 4
          %v453 = vadd.f32 %v449, %v451
          %v454 = vsub.f32 %v453, %v443
          %v455 = vrcp.pop %v454
          %v456 = vmul.f32 %v454, %v455
          %v457 = vsub.f32 1.0, %v456
          %v458 = vmul.f32 %v455, %v457
          %v459 = vadd.f32 %v455, %v458
          %vm460 = vweird.f32 %v454
          %vm461 = vweird.f32 %v455
          %vm462 = vmor %vm460, %vm461
          %v463 = vsel %vm462, %v455, %v459
          %v464 = vand.u32 2147483647, %v454
          %vm465 = vcmp.eq.f32.partialorder %v464, 8.507059e+37
          %v466 = vand.u32 %v454, 2147483648
          %v467 = vor.u32 1.1754944e-38, %v466
          %v468 = vsel %vm465, %v467, %v463
          %v469 = vmul.f32 %v443, %v468
          %v470 = vmin.f32 %v428, %v431
          %v471 = vmax.f32 %v429, %v435
          %v472 = vsub.f32 %v471, %v470
          %v473 = vmax.f32 %v472, 0.0
          %v475 = vrot.slane %v473, 1
          %v477 = vmul.f32 %v473, %v475
          %v478 = vsub.f32 %v477, %v454
          %v479 = vrcp.pop %v477
          %v480 = vmul.f32 %v477, %v479
          %v481 = vsub.f32 1.0, %v480
          %v482 = vmul.f32 %v479, %v481
          %v483 = vadd.f32 %v479, %v482
          %vm484 = vweird.f32 %v477
          %vm485 = vweird.f32 %v479
          %vm486 = vmor %vm484, %vm485
          %v487 = vsel %vm486, %v479, %v483
          %v488 = vand.u32 2147483647, %v477
          %vm489 = vcmp.eq.f32.partialorder %v488, 8.507059e+37
          %v490 = vand.u32 %v477, 2147483648
          %v491 = vor.u32 1.1754944e-38, %v490
          %v492 = vsel %vm489, %v491, %v487
          %v493 = vmul.f32 %v478, %v492
          %v494 = vsub.f32 %v469, %v493
          %v495 = vsub.f32 1.0, %v494
          %v496 = vsel %vm377, %v495, 0.0
          %497 = vadd.xlane.f32.xlu0 %v496
          %v498 = vpop.xlane.xlu0 %497
          %v499 = vrot.slane %v498, 4
          %v500 = vadd.f32 %v498, %v499
          %v501 = vrot.slane %v500, 2
          %v502 = vadd.f32 %v500, %v501
          %v503 = vrot.slane %v502, 1
          %v504 = vadd.f32 %v502, %v503
          %s505 = vtos %v504
          %v506 = vstv %s505
          %v507 = vmul.f32 %v506, %v422
          %v508 = vlaneseq
          %v509 = vand.u32 %v508, 127
          %vm510 = vcmp.eq.s32.totalorder %v344, 0
          %vm511 = vcmp.eq.s32.totalorder %v509, 0
          %vm512 = vmand %vm510, %vm511
          %v513 = vperm.slane %v388, 0
          %v514 = vsel %vm512, %v513, 0.0
          %vm515 = vcmp.eq.s32.totalorder %v509, 1
          %vm516 = vmand %vm510, %vm515
          %v517 = vperm.slane %v388, 1
          %v518 = vsel %vm516, %v517, 0.0
          %v519 = vadd.f32 %v514, %v518
          %vm520 = vcmp.eq.s32.totalorder %v509, 2
          %vm521 = vmand %vm510, %vm520
          %v522 = vsel %vm521, %v423, 0.0
          %v523 = vadd.f32 %v519, %v522
          %vm524 = vcmp.eq.s32.totalorder %v509, 3
          %vm525 = vmand %vm510, %vm524
          %v526 = vsel %vm525, %v507, 0.0
          %v527 = vadd.f32 %v523, %v526
          %528 = vst [vmem:[%s297] sm:$0xff] %v527
        $region60: #{tpu_custom_call.1} parent=35 // pred_fallthru
          _
        %s529 = sand.u32 %s143, 1
        %s530 = scalar_lea.sflag [#allocation5], %s529
        %s531 = sand.u32 %s143, 1
        %s532 = smul.addr %s531, 8
        %s533 = scalar_lea.vmem [#allocation11], %s532
        // Predicated region
        $region61: #{tpu_custom_call.1} parent=35 // pred_check
          %p534 = pneg %p153
        $region62: #{tpu_custom_call.1} parent=35 // pred_check_branch
          %536 = sbr.rel (%p534) target = $region64
        $region63: #{tpu_custom_call.1} parent=35 // pred_region
          %538 = vsyncadd %s530, 0
          %s539 = smul.addr %s29, 8
          %s540 = scalar_lea.hbm %s4, %s539
          %s542 = sshll.u32 %s533, 4
          %s543 = int_to_ptr.vmem [resolvable:$true] %s542
          %s544 = sshll.u32 %s540, 4
          %s545 = int_to_ptr.hbm [resolvable:$true] %s544
          %547 = dma.vmem_to_hbm [thread:$0]  %s543, 128, %s545, %s530
        $region64: #{tpu_custom_call.1} parent=35 // pred_fallthru
          _
      $region36: #{tpu_custom_call.1} parent=5 // pred_fallthru
        _
      %p548 = scmp.le.s32.totalorder 2, %s20
      // Predicated region
      $region65: #{tpu_custom_call.1} parent=5 // pred_check
        %p549 = pneg %p548
      $region66: #{tpu_custom_call.1} parent=5 // pred_check_branch
        %551 = sbr.rel (%p549) target = $region68
      $region67: #{tpu_custom_call.1} parent=5 // pred_region
        %s552 = ssub.s32 %s20, 2
        // Predicated region
        $region69: #{tpu_custom_call.1} parent=67 // pred_check
          %p553 = pneg %p159
        $region70: #{tpu_custom_call.1} parent=67 // pred_check_branch
          %555 = sbr.rel (%p553) target = $region72
        $region71: #{tpu_custom_call.1} parent=67 // pred_region
          %s556 = sand.u32 %s144, 1
          %s557 = scalar_lea.sflag [#allocation5], %s556
          %s558 = sand.u32 %s144, 1
          %s559 = smul.addr %s558, 8
          %s560 = scalar_lea.vmem [#allocation11], %s559
          %562 = dma.done %s557, 128
        $region72: #{tpu_custom_call.1} parent=67 // pred_fallthru
          _
      $region68: #{tpu_custom_call.1} parent=5 // pred_fallthru
        _
    $region6: #{tpu_custom_call.1} parent=1 // loop_footer
      %s24 = sadd.s32 1, %s20
    $region7: #{tpu_custom_call.1} parent=1 // loop_footer_branch
      %19 = sbr.rel target = $region3
    $region8: #{tpu_custom_call.1} parent=1 // loop_exit
      _
    %563 = vsyncpa [#allocation4], 1
    %s564 = scalar_lea.sflag [#allocation4], 1
    %565 = vsyncpa %s564, 1
    %566 = vsyncpa [#allocation8], 1
    %s567 = scalar_lea.sflag [#allocation8], 1
    %568 = vsyncpa %s567, 1
    %569 = vsyncpa [#allocation5], 1
    %s570 = scalar_lea.sflag [#allocation5], 1
    %571 = vsyncpa %s570, 1
    %572 = vsyncpa [#allocation6], 1
    %s573 = scalar_lea.sflag [#allocation6], 1
    %574 = vsyncpa %s573, 1

</llo_original>
